<compile_context>
chip_gen: v6e
topology: v6e:2x2x1
jax: 0.10.0
libtpu: 0.0.40
codegen_flags: <defaults>
</compile_context>

<pallas_src>
import jax
import jax.numpy as jnp
from jax.experimental import pallas as pl
from jax.experimental.pallas import tpu as pltpu


# ----------------------------- tiling helpers ------------------------------

TM_CAP, TN_CAP, TK_CAP = 512, 512, 1024   # f32 caps; ~10 MiB double-buffered
M_ALIGN, LANE_ALIGN = 8, 128


def _cdiv(a: int, b: int) -> int:
    return (a + b - 1) // b


def _round_up(x: int, m: int) -> int:
    return ((x + m - 1) // m) * m


def _pick_tile(dim: int, cap: int, align: int, min_blocks: int = 1):
    """Balanced tile for one dim -> (tile, padded_dim, n_blocks).

    Single block: tile == full dim (legal block shape, zero padding).
    Multiple blocks: blocks balanced against the dim so a size just over the
    cap doesn't spawn a nearly-all-padding tile.
    """
    nb = max(_cdiv(dim, cap), min_blocks)
    if nb <= 1:
        return dim, dim, 1
    tile = _round_up(_cdiv(dim, nb), align)
    padded = _round_up(dim, tile)
    return tile, padded, padded // tile


# -------------------------------- kernel -----------------------------------

def linear_kernel(x_ref, wt_ref, b_ref, o_ref):
    # x_ref:  (tm, tk) activations tile
    # wt_ref: (tk, tn) weight tile, already (IN, OUT) layout -> MXU-friendly
    # b_ref:  (1, tn)  bias tile for this OUT block
    # o_ref:  (tm, tn) f32 output tile, resident across the whole K sweep
    k = pl.program_id(2)

    @pl.when(k == 0)
    def _():
        # Initialize the resident output block with the broadcast bias; the
        # k==last finalize branch (and the VMEM accumulator) are gone.
        o_ref[...] = jnp.broadcast_to(b_ref[...], o_ref.shape).astype(o_ref.dtype)

    o_ref[...] += jnp.dot(
        x_ref[...], wt_ref[...], preferred_element_type=jnp.float32
    )


# ------------------------------ param prep ---------------------------------

def prepare_linear_params(weight, bias):
    """One-time layout work, hoisted out of the per-call path.

    weight: (OUT, IN)  (PyTorch nn.Linear layout), bias: (OUT,)
    Stores W^T padded to (K_pad, N_pad) and bias as (1, N_pad).
    """
    OUT, IN = weight.shape
    assert bias.shape == (OUT,)

    tk, K_pad, _ = _pick_tile(IN, TK_CAP, LANE_ALIGN)
    tn, N_pad, _ = _pick_tile(OUT, TN_CAP, LANE_ALIGN)

    wt = weight.T                      # (IN, OUT), MXU-ready
    if (K_pad, N_pad) != (IN, OUT):
        wt = jnp.zeros((K_pad, N_pad), weight.dtype).at[:IN, :OUT].set(wt)
    b2 = bias.reshape(1, OUT)
    if N_pad != OUT:
        b2 = jnp.zeros((1, N_pad), bias.dtype).at[:, :OUT].set(b2)

    return {
        "wt": wt, "b": b2, "in_dim": IN, "out_dim": OUT,
        "tk": tk, "tn": tn, "K_pad": K_pad, "N_pad": N_pad,
    }


# -------------------------------- forward ----------------------------------

def linear_forward(x, params):
    """y = x @ W^T + b using the pre-transposed/padded params."""
    IN = params["in_dim"]
    OUT = params["out_dim"]
    tk, tn = params["tk"], params["tn"]
    K_pad, N_pad = params["K_pad"], params["N_pad"]
    wt, b2 = params["wt"], params["b"]

    lead = x.shape[:-1]
    assert x.shape[-1] == IN
    x2 = x.reshape(-1, IN)
    B = x2.shape[0]

    # >=2 M blocks once the batch is large enough keeps both v7x TCs busy.
    min_m_blocks = 2 if B >= 2 * 128 else 1
    tm, M_pad, _ = _pick_tile(B, TM_CAP, M_ALIGN, min_blocks=min_m_blocks)

    # Only materialize a padded copy of x when actually required.
    x_in = x2
    if (M_pad, K_pad) != (B, IN):
        x_in = jnp.zeros((M_pad, K_pad), x2.dtype).at[:B, :IN].set(x2)

    grid = (M_pad // tm, N_pad // tn, K_pad // tk)

    out = pl.pallas_call(
        linear_kernel,
        out_shape=jax.ShapeDtypeStruct((M_pad, N_pad), jnp.float32),
        grid=grid,
        in_specs=[
            pl.BlockSpec((tm, tk), lambda i, j, k: (i, k)),  # x
            pl.BlockSpec((tk, tn), lambda i, j, k: (k, j)),  # W^T
            pl.BlockSpec((1, tn), lambda i, j, k: (0, j)),   # bias
        ],
        out_specs=pl.BlockSpec((tm, tn), lambda i, j, k: (i, j)),
        compiler_params=pltpu.CompilerParams(
            dimension_semantics=("parallel", "parallel", "arbitrary"),
            vmem_limit_bytes=32 * 1024 * 1024,
        ),
        cost_estimate=pl.CostEstimate(
            flops=2 * M_pad * N_pad * K_pad,
            transcendentals=0,
            bytes_accessed=4 * (M_pad * K_pad + K_pad * N_pad
                                + M_pad * N_pad + N_pad),
        ),
    )(x_in, wt, b2)

    # Slice padding off only if any was added.
    if (M_pad, N_pad) != (B, OUT):
        out = out[:B, :OUT]
    return out.reshape(*lead, OUT)


# --------------------------------- main -------------------------------------

if __name__ == "__main__":
    # Small shapes consistent with nn.Linear(input_dim, output_dim)
    batch, input_dim, output_dim = 8, 32, 16

    key = jax.random.PRNGKey(0)
    kx, kw, kb = jax.random.split(key, 3)

    x = jax.random.normal(kx, (batch, input_dim), dtype=jnp.float32)

    # Deterministic param init mimicking PyTorch Linear: U(-1/sqrt(in), 1/sqrt(in))
    bound = 1.0 / (input_dim ** 0.5)
    weight = jax.random.uniform(
        kw, (output_dim, input_dim), minval=-bound, maxval=bound, dtype=jnp.float32
    )
    bias = jax.random.uniform(
        kb, (output_dim,), minval=-bound, maxval=bound, dtype=jnp.float32
    )

    params = prepare_linear_params(weight, bias)   # hoisted one-time layout work
    out = linear_forward(x, params)
    out = jax.block_until_ready(out)

    ref = x @ weight.T + bias
    assert out.shape == (batch, output_dim)
    assert jnp.allclose(out, ref, atol=1e-5, rtol=1e-5)

    # Secondary check: ragged shapes exercising padding + multi-block M path.
    kx2, kw2, kb2 = jax.random.split(jax.random.PRNGKey(1), 3)
    B2, IN2, OUT2 = 300, 200, 130
    x2 = jax.random.normal(kx2, (B2, IN2), dtype=jnp.float32)
    w2 = jax.random.normal(kw2, (OUT2, IN2), dtype=jnp.float32) * 0.05
    b2 = jax.random.normal(kb2, (OUT2,), dtype=jnp.float32) * 0.05
    p2 = prepare_linear_params(w2, b2)
    out2 = jax.block_until_ready(linear_forward(x2, p2))
    ref2 = x2 @ w2.T + b2
    assert out2.shape == (B2, OUT2)
    assert jnp.allclose(out2, ref2, atol=1e-4, rtol=1e-4)

    print("KERNEL_OK")
</pallas_src>

<mosaic_0001>
module attributes {stable_mosaic.version = 11 : i64} {
  func.func @linear_kernel(%arg0: i32, %arg1: i32, %arg2: i32, %arg3: memref<8x32xf32, #tpu.memory_space<vmem>>, %arg4: memref<32x16xf32, #tpu.memory_space<vmem>>, %arg5: memref<1x16xf32, #tpu.memory_space<vmem>>, %arg6: memref<8x16xf32, #tpu.memory_space<vmem>>) attributes {dimension_semantics = [#tpu.dimension_semantics<parallel>, #tpu.dimension_semantics<parallel>, #tpu.dimension_semantics<arbitrary>], iteration_bounds = array<i64: 1, 1, 1>, scalar_prefetch = 0 : i64, scratch_operands = 0 : i64, tpu.core_type = #tpu.core_type<tc>, window_params = [{transform_indices = @transform_0, window_bounds = array<i64: 8, 32>}, {transform_indices = @transform_1, window_bounds = array<i64: 32, 16>}, {transform_indices = @transform_2, window_bounds = array<i64: 1, 16>}, {transform_indices = @transform_3, window_bounds = array<i64: 8, 16>}]} {
    %c0_i32 = arith.constant 0 : i32
    %0 = arith.cmpi eq, %arg2, %c0_i32 : i32
    %1 = arith.extui %0 : i1 to i32
    %c0_i32_0 = arith.constant 0 : i32
    %2 = arith.cmpi ne, %1, %c0_i32_0 : i32
    scf.if %2 {
      %c0_8 = arith.constant 0 : index
      %c0_9 = arith.constant 0 : index
      %9 = vector.load %arg5[%c0_8, %c0_9] : memref<1x16xf32, #tpu.memory_space<vmem>>, vector<1x16xf32>
      %10 = vector.shape_cast %9 : vector<1x16xf32> to vector<1x16xf32>
      %11 = vector.broadcast %10 : vector<1x16xf32> to vector<8x16xf32>
      %c0_10 = arith.constant 0 : index
      %c0_11 = arith.constant 0 : index
      %12 = vector.load %arg6[%c0_10, %c0_11] : memref<8x16xf32, #tpu.memory_space<vmem>>, vector<8x16xf32>
      tpu.vector_store %arg6[%c0_10, %c0_11], %11 {strides = array<i32>} : memref<8x16xf32, #tpu.memory_space<vmem>>, vector<8x16xf32>,
    } else {
    }
    %c0 = arith.constant 0 : index
    %c0_1 = arith.constant 0 : index
    %3 = vector.load %arg6[%c0, %c0_1] : memref<8x16xf32, #tpu.memory_space<vmem>>, vector<8x16xf32>
    %c0_2 = arith.constant 0 : index
    %c0_3 = arith.constant 0 : index
    %4 = vector.load %arg3[%c0_2, %c0_3] : memref<8x32xf32, #tpu.memory_space<vmem>>, vector<8x32xf32>
    %c0_4 = arith.constant 0 : index
    %c0_5 = arith.constant 0 : index
    %5 = vector.load %arg4[%c0_4, %c0_5] : memref<32x16xf32, #tpu.memory_space<vmem>>, vector<32x16xf32>
    %cst = arith.constant dense<0.000000e+00> : vector<8x16xf32>
    %6 = tpu.matmul %4, %5, %cst {dimension_numbers = #tpu.dot_dimension_numbers<[1], [0], [0], [1], [0, 0, 1, 1], [], []>} : vector<8x32xf32>, vector<32x16xf32>, vector<8x16xf32> -> vector<8x16xf32>
    %7 = arith.addf %3, %6 : vector<8x16xf32>
    %c0_6 = arith.constant 0 : index
    %c0_7 = arith.constant 0 : index
    %8 = vector.load %arg6[%c0_6, %c0_7] : memref<8x16xf32, #tpu.memory_space<vmem>>, vector<8x16xf32>
    tpu.vector_store %arg6[%c0_6, %c0_7], %7 {strides = array<i32>} : memref<8x16xf32, #tpu.memory_space<vmem>>, vector<8x16xf32>,
    return
  }
  func.func @transform_0(%arg0: i32, %arg1: i32, %arg2: i32) -> (i32, i32) {
    %c0_i32 = arith.constant 0 : i32
    return %arg0, %arg2 : i32, i32
  }
  func.func @transform_1(%arg0: i32, %arg1: i32, %arg2: i32) -> (i32, i32) {
    %c0_i32 = arith.constant 0 : i32
    return %arg2, %arg1 : i32, i32
  }
  func.func @transform_2(%arg0: i32, %arg1: i32, %arg2: i32) -> (i32, i32) {
    %c0_i32 = arith.constant 0 : i32
    %c0_i32_0 = arith.constant 0 : i32
    return %c0_i32, %arg1 : i32, i32
  }
  func.func @transform_3(%arg0: i32, %arg1: i32, %arg2: i32) -> (i32, i32) {
    %c0_i32 = arith.constant 0 : i32
    return %arg0, %arg1 : i32, i32
  }
}

</mosaic_0001>

<llo_original>
// kernel: tpu_custom_call.1
$region0: #{tpu_custom_call.1}
  #allocation0 [shape = 'u32[]', space=smem, size = 0x4, offset = 0x4, fixed_abs, tag = 'smem constant byte address 0x4 - core index']
  #allocation1 [shape = 'u32[144,128]{1,0:T(1,128)}', space=vmem, size = 0x12000, scoped, tag = 'internal scratch']
  %s0 = inlined_call_operand.vmem [shape: f32[8,32], index: 0, kind: input, shape index: {}]
  %s1 = inlined_call_operand.vmem [shape: f32[32,16], index: 1, kind: input, shape index: {}]
  %s2 = inlined_call_operand.vmem [shape: f32[1,16], index: 2, kind: input, shape index: {}]
  %s3 = inlined_call_operand.hbm [shape: f32[8,16], index: 3, kind: output, shape index: {}]
  %s4 = sld [smem:[#allocation0]]
  $region26: #{tpu_custom_call.1} parent=0
    _
  %s6 = ssub.s32 1, %s4
  %s7 = scalar_select 0, %s6, %s4
  $region1: #{tpu_custom_call.1} parent=0
    #allocation2 [shape = 'u8[4096]{0}', space=vmem, size = 0x1000, scoped, tag = 'output window, operand 0, single buffered']
    #allocation3 [shape = 's32[1]{0}', space=sflag, size = 0x4, scoped, tag = 'scoped memory for tpu_custom_call.1']
    %8 = vsyncpa [#allocation3], 0
    // Predicated region
    $region2: #{tpu_custom_call.1} parent=1 // pred_check
      _
    $region3: #{tpu_custom_call.1} parent=1 // pred_check_branch
      %10 = sbr.rel (0) target = $region5
    $region4: #{tpu_custom_call.1} parent=1 // pred_region
      _
    $region5: #{tpu_custom_call.1} parent=1 // pred_fallthru
      _
    // Predicated region
    $region6: #{tpu_custom_call.1} parent=1 // pred_check
      _
    $region7: #{tpu_custom_call.1} parent=1 // pred_check_branch
      %12 = sbr.rel (0) target = $region9
    $region8: #{tpu_custom_call.1} parent=1 // pred_region
      _
    $region9: #{tpu_custom_call.1} parent=1 // pred_fallthru
      _
    // Predicated region
    $region10: #{tpu_custom_call.1} parent=1 // pred_check
      _
    $region11: #{tpu_custom_call.1} parent=1 // pred_check_branch
      %14 = sbr.rel (0) target = $region13
    $region12: #{tpu_custom_call.1} parent=1 // pred_region
      _
    $region13: #{tpu_custom_call.1} parent=1 // pred_fallthru
      _
    %p15 = scmp.eq.s32.totalorder 0, 0
    // Predicated region
    $region14: #{tpu_custom_call.1} parent=1 // pred_check
      %p16 = pneg %p15
    $region15: #{tpu_custom_call.1} parent=1 // pred_check_branch
      %18 = sbr.rel (%p16) target = $region17
    $region16: #{tpu_custom_call.1} parent=1 // pred_region
      %v19 = vld [vmem:[%s2] sm:$0x1]
      %v21 = vlaneseq
      %v22 = vshrl.u32 %v21, 7
      %v23 = vsub.s32 0, %v22
      %v24 = vrot.slane %v19, %v23
      %vm26 = vcmask 130048
      %27 = vst.msk [vmem:[#allocation2] sm:$0xff] %vm26, %v24
    $region17: #{tpu_custom_call.1} parent=1 // pred_fallthru
      _
    %v28 = vld [vmem:[#allocation2] sm:$0xff]
    %v29 = vld [vmem:[%s0] sm:$0xff]
    %v30 = vld [vmem:[%s1] sm:$0xff]
    %v31 = vld [vmem:[%s1 + $0x8] sm:$0xff]
    %v32 = vld [vmem:[%s1 + $0x10] sm:$0xff]
    %v33 = vld [vmem:[%s1 + $0x18] sm:$0xff]
    %vm34 = vcmask 261120
    %v36 = vsel %vm34, %v29, 0
    %38 = vmatprep.subr.mxu0 0.0
    %39 = vmatpush1.msra.mxu0 0.0
    %40 = vmatprep.subr.mxu0 0.0
    %41 = vmatpush1.msra.mxu0 0.0
    %42 = vmatprep.subr.mxu0 0.0
    %43 = vmatpush1.msra.mxu0 0.0
    %44 = vmatprep.subr.mxu0 0.0
    %45 = vmatpush1.msra.mxu0 0.0
    %46 = vmatprep.subr.mxu0 0.0
    %47 = vmatpush1.msra.mxu0 0.0
    %48 = vmatprep.subr.mxu0 0.0
    %49 = vmatpush1.msra.mxu0 0.0
    %50 = vmatprep.subr.mxu0 0.0
    %51 = vmatpush1.msra.mxu0 0.0
    %52 = vmatprep.subr.mxu0 0.0
    %53 = vmatpush1.msra.mxu0 0.0
    %54 = vmatprep.subr.mxu0 0.0
    %55 = vmatpush1.msra.mxu0 0.0
    %56 = vmatprep.subr.mxu0 0.0
    %57 = vmatpush1.msra.mxu0 0.0
    %58 = vmatprep.subr.mxu0 0.0
    %59 = vmatpush1.msra.mxu0 0.0
    %60 = vmatprep.subr.mxu0 0.0
    %61 = vmatpush1.msra.mxu0 0.0
    %62 = vmatprep.subr.mxu0 0.0
    %63 = vmatpush1.msra.mxu0 %v33
    %64 = vmatprep.subr.mxu0 0.0
    %65 = vmatpush1.msra.mxu0 %v32
    %66 = vmatprep.subr.mxu0 0.0
    %67 = vmatpush1.msra.mxu0 %v31
    %68 = vmatprep.subr.mxu0 0.0
    %69 = vmatpush1.msra.mxu0 %v30
    %70 = vmatprep.subr.mxu0 0.0
    %71 = vmatpush2.msra.mxu0 0.0
    %72 = vmatprep.subr.mxu0 0.0
    %73 = vmatpush2.msra.mxu0 0.0
    %74 = vmatprep.subr.mxu0 0.0
    %75 = vmatpush2.msra.mxu0 0.0
    %76 = vmatprep.subr.mxu0 0.0
    %77 = vmatpush2.msra.mxu0 0.0
    %78 = vmatprep.subr.mxu0 0.0
    %79 = vmatpush2.msra.mxu0 0.0
    %80 = vmatprep.subr.mxu0 0.0
    %81 = vmatpush2.msra.mxu0 0.0
    %82 = vmatprep.subr.mxu0 0.0
    %83 = vmatpush2.msra.mxu0 0.0
    %84 = vmatprep.subr.mxu0 0.0
    %85 = vmatpush2.msra.mxu0 0.0
    %86 = vmatprep.subr.mxu0 0.0
    %87 = vmatpush2.msra.mxu0 0.0
    %88 = vmatprep.subr.mxu0 0.0
    %89 = vmatpush2.msra.mxu0 0.0
    %90 = vmatprep.subr.mxu0 0.0
    %91 = vmatpush2.msra.mxu0 0.0
    %92 = vmatprep.subr.mxu0 0.0
    %93 = vmatpush2.msra.mxu0 0.0
    %94 = vmatprep.subr.mxu0 0.0
    %95 = vmatpush2.msra.mxu0 0.0
    %96 = vmatprep.subr.mxu0 0.0
    %97 = vmatpush2.msra.mxu0 0.0
    %98 = vmatprep.subr.mxu0 0.0
    %99 = vmatpush2.msra.mxu0 0.0
    %100 = vmatprep.subr.mxu0 0.0
    %101 = vmatpush2.msra.mxu0 0.0
    %102 = vmatprep.mubr.f32.mxu0 0.0
    %103 = vmatmul.mubr.f32.gmra.mxu0 %v36
    %v104 = vpop.f32.mrf.mxu0
    %v105 = vadd.f32 0.0, %v104
    %v106 = vpop.f32.mrf.mxu0
    %107 = vdwg.mxu0
    %v108 = vadd.f32 %v28, %v105
    %vm109 = vcmask 130048
    %110 = vst.msk [vmem:[#allocation2] sm:$0xff] %vm109, %v108
    // Predicated region
    $region18: #{tpu_custom_call.1} parent=1 // pred_check
      _
    $region19: #{tpu_custom_call.1} parent=1 // pred_check_branch
      %112 = sbr.rel (0) target = $region21
    $region20: #{tpu_custom_call.1} parent=1 // pred_region
      %s114 = ssub.s32 128, 128
      %115 = vsyncadd [#allocation3], %s114
      %s117 = sshll.u32 [#allocation2], 4
      %s118 = int_to_ptr.vmem [resolvable:$true] %s117
      %120 = dma.vmem_to_hbm [thread:$0]  %s118, 128, %s3, [#allocation3]
    $region21: #{tpu_custom_call.1} parent=1 // pred_fallthru
      _
    // Predicated region
    $region22: #{tpu_custom_call.1} parent=1 // pred_check
      _
    $region23: #{tpu_custom_call.1} parent=1 // pred_check_branch
      %122 = sbr.rel (0) target = $region25
    $region24: #{tpu_custom_call.1} parent=1 // pred_region
      %123 = dma.done [#allocation3], 128
    $region25: #{tpu_custom_call.1} parent=1 // pred_fallthru
      _
    %124 = vsyncpa [#allocation3], 1

</llo_original>
